<compile_context>
chip_gen: v6e
topology: v6e:2x2x1
jax: 0.10.0
libtpu: 0.0.40
codegen_flags: <defaults>
</compile_context>

<pallas_src>
import functools

import jax
import jax.numpy as jnp
from jax import lax
from jax.experimental import pallas as pl
from jax.experimental.pallas import tpu as pltpu


def _focal_loss_kernel(logits_ref, labels_ref, partial_ref, *,
                       alpha_t, gamma, batch, block_rows):
    i = pl.program_id(0)

    logits = logits_ref[...].astype(jnp.float32)            # (TB, C)
    labels = labels_ref[...]                                 # (TB, 1) int32

    # Row-wise log-sum-exp along the class (lane) axis — no probs materialization.
    m = jnp.max(logits, axis=1, keepdims=True)                     # (TB, 1)
    s = jnp.sum(jnp.exp(logits - m), axis=1, keepdims=True)        # (TB, 1)
    lse = m + jnp.log(s)                                           # (TB, 1)

    # Label logit via iota-compare + masked reduce (no gather on TPU).
    class_ids = lax.broadcasted_iota(jnp.int32, logits.shape, 1)
    sel = class_ids == labels                                      # (TB, C)
    x_lbl = jnp.sum(jnp.where(sel, logits, 0.0), axis=1, keepdims=True)  # (TB, 1)

    # p_t kept explicit so the reference's `log(p_t + 1e-8)` is matched exactly.
    p_t = jnp.exp(x_lbl - lse)                                     # (TB, 1)
    ce = -jnp.log(p_t + 1e-8)                                      # (TB, 1)

    one_minus = 1.0 - p_t
    g = float(gamma)
    if g == 2.0:
        mod = one_minus * one_minus                                # VPU mul, no EUP pow
    elif g.is_integer() and g >= 0.0:
        mod = lax.integer_pow(one_minus, int(g))
    else:
        mod = one_minus ** jnp.float32(g)

    focal = jnp.float32(alpha_t) * mod * ce                        # (TB, 1)

    # Mask padded rows of the last (partial) tile. Static no-op if B % TB == 0.
    if batch % block_rows != 0:
        row_ids = lax.broadcasted_iota(jnp.int32, focal.shape, 0) + i * block_rows
        focal = jnp.where(row_ids < batch, focal, 0.0)

    # Per-block partial sum, broadcast over a lane-dense (1, 8, 128) tile so the
    # writeback is an unmasked store and each grid block owns a distinct output
    # tile (=> the batch grid axis can be "parallel").
    psum = jnp.sum(focal, keepdims=True)                           # (1, 1)
    partial_ref[...] = jnp.broadcast_to(psum[None], partial_ref.shape)


def focal_loss_single_label(logits, labels, *, alpha=0.25, gamma=2.0,
                            block_rows=None):
    """logits: (B, C) float (f32 or bf16); labels: (B,) int. Returns scalar f32 loss."""
    B, C = logits.shape
    labels2d = labels.astype(jnp.int32).reshape(B, 1)

    # alpha_t of the reference is a compile-time constant:
    #   where(one_hot==1, alpha, 1-alpha).sum(dim=1) = alpha + (C-1)*(1-alpha)
    alpha_t = float(alpha) + (C - 1) * (1.0 - float(alpha))

    # Tile the batch axis: target ~4 MiB per input buffer (x2 double-buffering),
    # rows a multiple of the sublane packing (8 for f32, 16 for bf16).
    itemsize = jnp.dtype(logits.dtype).itemsize
    row_align = 16 if itemsize == 2 else 8
    if block_rows is None:
        target_bytes = 4 * 1024 * 1024
        tb = max(row_align, target_bytes // max(1, C * itemsize))
    else:
        tb = int(block_rows)
    if tb >= B:
        tb = B                                          # single block == full array
    else:
        tb = max(row_align, (tb // row_align) * row_align)

    num_blocks = pl.cdiv(B, tb)

    kernel = functools.partial(
        _focal_loss_kernel,
        alpha_t=alpha_t, gamma=float(gamma), batch=B, block_rows=tb)

    partials = pl.pallas_call(
        kernel,
        out_shape=jax.ShapeDtypeStruct((num_blocks, 8, 128), jnp.float32),
        grid=(num_blocks,),
        in_specs=[
            pl.BlockSpec((tb, C), lambda i: (i, 0)),
            pl.BlockSpec((tb, 1), lambda i: (i, 0)),
        ],
        out_specs=pl.BlockSpec((1, 8, 128), lambda i: (i, 0, 0)),
        compiler_params=pltpu.CompilerParams(
            dimension_semantics=("parallel",)),
    )(logits, labels2d)

    # reduction='mean': each block's tile carries its partial sum (broadcast);
    # pick one lane per block and finish the mean with a tiny XLA reduce.
    return jnp.sum(partials[:, 0, 0]) / jnp.float32(B)


def _reference(logits, labels, alpha=0.25, gamma=2.0):
    probs = jax.nn.softmax(logits.astype(jnp.float32), axis=1)
    one_hot = jax.nn.one_hot(labels, logits.shape[1], dtype=jnp.float32)
    p_t = jnp.sum(probs * one_hot, axis=1)
    mod = (1.0 - p_t) ** gamma
    alpha_t = jnp.sum(jnp.where(one_hot == 1.0, alpha, 1.0 - alpha), axis=1)
    ce = -jnp.log(p_t + 1e-8)
    return jnp.mean(alpha_t * mod * ce)


if __name__ == "__main__":
    key = jax.random.PRNGKey(0)
    k1, k2 = jax.random.split(key)

    B, C = 40, 32  # small (batch_size, num_classes)
    logits = jax.random.normal(k1, (B, C), dtype=jnp.float32)
    labels = jax.random.randint(k2, (B,), 0, C, dtype=jnp.int32)

    ref = _reference(logits, labels, alpha=0.25, gamma=2.0)

    # Default path (small B -> single full-array block).
    loss = focal_loss_single_label(logits, labels, alpha=0.25, gamma=2.0)
    loss = jax.block_until_ready(loss)
    assert jnp.allclose(loss, ref, rtol=1e-5, atol=1e-6), (loss, ref)

    # Explicitly tiled path: grid of 3 parallel blocks, last block partially masked.
    loss_tiled = focal_loss_single_label(
        logits, labels, alpha=0.25, gamma=2.0, block_rows=16)
    loss_tiled = jax.block_until_ready(loss_tiled)
    assert jnp.allclose(loss_tiled, ref, rtol=1e-5, atol=1e-6), (loss_tiled, ref)

    print("KERNEL_OK")
</pallas_src>

<mosaic_0001>
module attributes {stable_mosaic.version = 11 : i64} {
  func.func @_focal_loss_kernel(%arg0: i32, %arg1: memref<40x32xf32, #tpu.memory_space<vmem>>, %arg2: memref<40x1xi32, #tpu.memory_space<vmem>>, %arg3: memref<1x8x128xf32, #tpu.memory_space<vmem>>) attributes {dimension_semantics = [#tpu.dimension_semantics<parallel>], iteration_bounds = array<i64: 1>, scalar_prefetch = 0 : i64, scratch_operands = 0 : i64, tpu.core_type = #tpu.core_type<tc>, window_params = [{transform_indices = @transform_0, window_bounds = array<i64: 40, 32>}, {transform_indices = @transform_1, window_bounds = array<i64: 40, 1>}, {transform_indices = @transform_2, window_bounds = array<i64: 1, 8, 128>}]} {
    %c0 = arith.constant 0 : index
    %c0_0 = arith.constant 0 : index
    %0 = vector.load %arg1[%c0, %c0_0] : memref<40x32xf32, #tpu.memory_space<vmem>>, vector<40x32xf32>
    %c0_1 = arith.constant 0 : index
    %c0_2 = arith.constant 0 : index
    %1 = vector.load %arg2[%c0_1, %c0_2] : memref<40x1xi32, #tpu.memory_space<vmem>>, vector<40x1xi32>
    %cst = arith.constant dense<0xFF800000> : vector<40xf32>
    %2 = vector.multi_reduction <maximumf>, %0, %cst [1] : vector<40x32xf32> to vector<40xf32>
    %3 = vector.shape_cast %2 : vector<40xf32> to vector<40x1xf32>
    %4 = vector.broadcast %3 : vector<40x1xf32> to vector<40x32xf32>
    %5 = arith.subf %0, %4 : vector<40x32xf32>
    %6 = math.exp %5 : vector<40x32xf32>
    %cst_3 = arith.constant dense<0.000000e+00> : vector<40xf32>
    %7 = vector.multi_reduction <add>, %6, %cst_3 [1] : vector<40x32xf32> to vector<40xf32>
    %8 = vector.shape_cast %7 : vector<40xf32> to vector<40x1xf32>
    %9 = math.log %8 : vector<40x1xf32>
    %10 = arith.addf %3, %9 : vector<40x1xf32>
    %11 = tpu.iota {dimensions = array<i32: 1>} : vector<40x32xi32>
    %12 = vector.broadcast %1 : vector<40x1xi32> to vector<40x32xi32>
    %13 = arith.cmpi eq, %11, %12 : vector<40x32xi32>
    %cst_4 = arith.constant 0.000000e+00 : f32
    %14 = vector.broadcast %cst_4 : f32 to vector<40x32xf32>
    %15 = arith.select %13, %0, %14 : vector<40x32xi1>, vector<40x32xf32>
    %cst_5 = arith.constant dense<0.000000e+00> : vector<40xf32>
    %16 = vector.multi_reduction <add>, %15, %cst_5 [1] : vector<40x32xf32> to vector<40xf32>
    %17 = vector.shape_cast %16 : vector<40xf32> to vector<40x1xf32>
    %18 = arith.subf %17, %10 : vector<40x1xf32>
    %19 = math.exp %18 : vector<40x1xf32>
    %cst_6 = arith.constant 9.99999993E-9 : f32
    %20 = vector.broadcast %cst_6 : f32 to vector<40x1xf32>
    %21 = arith.addf %19, %20 : vector<40x1xf32>
    %22 = math.log %21 : vector<40x1xf32>
    %cst_7 = arith.constant 0.000000e+00 : f32
    %23 = vector.broadcast %cst_7 : f32 to vector<40x1xf32>
    %24 = arith.subf %23, %22 : vector<40x1xf32>
    %cst_8 = arith.constant 1.000000e+00 : f32
    %25 = vector.broadcast %cst_8 : f32 to vector<40x1xf32>
    %26 = arith.subf %25, %19 : vector<40x1xf32>
    %27 = arith.mulf %26, %26 : vector<40x1xf32>
    %cst_9 = arith.constant 2.350000e+01 : f32
    %28 = vector.broadcast %cst_9 : f32 to vector<40x1xf32>
    %29 = arith.mulf %28, %27 : vector<40x1xf32>
    %30 = arith.mulf %29, %24 : vector<40x1xf32>
    %31 = vector.shape_cast %30 : vector<40x1xf32> to vector<1x40x1xf32>
    %cst_10 = arith.constant dense<0.000000e+00> : vector<1xf32>
    %32 = vector.multi_reduction <add>, %31, %cst_10 [1, 2] : vector<1x40x1xf32> to vector<1xf32>
    %33 = vector.shape_cast %32 : vector<1xf32> to vector<1x1x1xf32>
    %34 = vector.extract %33[0, 0, 0] : f32 from vector<1x1x1xf32>
    %35 = vector.broadcast %34 : f32 to vector<1x1xf32>
    %36 = vector.shape_cast %35 : vector<1x1xf32> to vector<1x1x1xf32>
    %37 = vector.shape_cast %36 : vector<1x1x1xf32> to vector<1x1x1xf32>
    %38 = vector.broadcast %37 : vector<1x1x1xf32> to vector<1x8x128xf32>
    %c0_11 = arith.constant 0 : index
    %c0_12 = arith.constant 0 : index
    %c0_13 = arith.constant 0 : index
    %39 = vector.load %arg3[%c0_11, %c0_12, %c0_13] : memref<1x8x128xf32, #tpu.memory_space<vmem>>, vector<1x8x128xf32>
    tpu.vector_store %arg3[%c0_11, %c0_12, %c0_13], %38 {strides = array<i32>} : memref<1x8x128xf32, #tpu.memory_space<vmem>>, vector<1x8x128xf32>,
    return
  }
  func.func @transform_0(%arg0: i32) -> (i32, i32) {
    %c0_i32 = arith.constant 0 : i32
    %c0_i32_0 = arith.constant 0 : i32
    return %arg0, %c0_i32 : i32, i32
  }
  func.func @transform_1(%arg0: i32) -> (i32, i32) {
    %c0_i32 = arith.constant 0 : i32
    %c0_i32_0 = arith.constant 0 : i32
    return %arg0, %c0_i32 : i32, i32
  }
  func.func @transform_2(%arg0: i32) -> (i32, i32, i32) {
    %c0_i32 = arith.constant 0 : i32
    %c0_i32_0 = arith.constant 0 : i32
    %c0_i32_1 = arith.constant 0 : i32
    return %arg0, %c0_i32, %c0_i32_0 : i32, i32, i32
  }
}

</mosaic_0001>

<llo_original>
// kernel: tpu_custom_call.1
$region0: #{tpu_custom_call.1}
  #allocation0 [shape = 'u32[]', space=smem, size = 0x4, offset = 0x4, fixed_abs, tag = 'smem constant byte address 0x4 - core index']
  #allocation1 [shape = 'u32[144,128]{1,0:T(1,128)}', space=vmem, size = 0x12000, scoped, tag = 'internal scratch']
  %s0 = inlined_call_operand.vmem [shape: f32[40,32], index: 0, kind: input, shape index: {}]
  %s1 = inlined_call_operand.vmem [shape: s32[40,1], index: 1, kind: input, shape index: {}]
  %s2 = inlined_call_operand.hbm [shape: f32[1,8,128], index: 2, kind: output, shape index: {}]
  %s3 = sld [smem:[#allocation0]]
  $region18: #{tpu_custom_call.1} parent=0
    _
  %s5 = ssub.s32 1, %s3
  %s6 = scalar_select 0, %s5, %s3
  $region1: #{tpu_custom_call.1} parent=0
    #allocation2 [shape = 'u8[4096]{0}', space=vmem, size = 0x1000, scoped, tag = 'output window, operand 0, single buffered']
    #allocation3 [shape = 's32[1]{0}', space=sflag, size = 0x4, scoped, tag = 'scoped memory for tpu_custom_call.1']
    %7 = vsyncpa [#allocation3], 0
    // Predicated region
    $region2: #{tpu_custom_call.1} parent=1 // pred_check
      _
    $region3: #{tpu_custom_call.1} parent=1 // pred_check_branch
      %9 = sbr.rel (0) target = $region5
    $region4: #{tpu_custom_call.1} parent=1 // pred_region
      _
    $region5: #{tpu_custom_call.1} parent=1 // pred_fallthru
      _
    // Predicated region
    $region6: #{tpu_custom_call.1} parent=1 // pred_check
      _
    $region7: #{tpu_custom_call.1} parent=1 // pred_check_branch
      %11 = sbr.rel (0) target = $region9
    $region8: #{tpu_custom_call.1} parent=1 // pred_region
      _
    $region9: #{tpu_custom_call.1} parent=1 // pred_fallthru
      _
    %v12 = vld [vmem:[%s0] sm:$0xff]
    %v13 = vld [vmem:[%s0 + $0x8] sm:$0xff]
    %v14 = vld [vmem:[%s0 + $0x10] sm:$0xff]
    %v15 = vld [vmem:[%s0 + $0x18] sm:$0xff]
    %v16 = vld [vmem:[%s0 + $0x20] sm:$0xff]
    %v17 = vld [vmem:[%s1] sm:$0xff]
    %v18 = vld [vmem:[%s1 + $0x8] sm:$0xff]
    %v19 = vld [vmem:[%s1 + $0x10] sm:$0xff]
    %v20 = vld [vmem:[%s1 + $0x18] sm:$0xff]
    %v21 = vld [vmem:[%s1 + $0x20] sm:$0xff]
    %vm22 = vcmask 261120
    %v23 = vsel %vm22, %v12, -inf
    %24 = vmax.xlane.f32.xlu0 %v23
    %v25 = vpop.xlane.xlu0 %24
    %v26 = vsel %vm22, %v13, -inf
    %27 = vmax.xlane.f32.xlu0 %v26
    %v28 = vpop.xlane.xlu0 %27
    %v29 = vsel %vm22, %v14, -inf
    %30 = vmax.xlane.f32.xlu0 %v29
    %v31 = vpop.xlane.xlu0 %30
    %v32 = vsel %vm22, %v15, -inf
    %33 = vmax.xlane.f32.xlu0 %v32
    %v34 = vpop.xlane.xlu0 %33
    %v35 = vsel %vm22, %v16, -inf
    %36 = vmax.xlane.f32.xlu0 %v35
    %v37 = vpop.xlane.xlu0 %36
    %v38 = vsub.f32 %v12, %v25
    %v39 = vsub.f32 %v13, %v28
    %v40 = vsub.f32 %v14, %v31
    %v41 = vsub.f32 %v15, %v34
    %v42 = vsub.f32 %v16, %v37
    %v43 = vmul.f32 %v38, 1.442695
    %v44 = vpow.pop %v43
    %v45 = vmul.f32 %v39, 1.442695
    %v46 = vpow.pop %v45
    %v47 = vmul.f32 %v40, 1.442695
    %v48 = vpow.pop %v47
    %v49 = vmul.f32 %v41, 1.442695
    %v50 = vpow.pop %v49
    %v51 = vmul.f32 %v42, 1.442695
    %v52 = vpow.pop %v51
    %v53 = vsel %vm22, %v44, 0.0
    %54 = vadd.xlane.f32.xlu0 %v53
    %v55 = vpop.xlane.xlu0 %54
    %v56 = vsel %vm22, %v46, 0.0
    %57 = vadd.xlane.f32.xlu0 %v56
    %v58 = vpop.xlane.xlu0 %57
    %v59 = vsel %vm22, %v48, 0.0
    %60 = vadd.xlane.f32.xlu0 %v59
    %v61 = vpop.xlane.xlu0 %60
    %v62 = vsel %vm22, %v50, 0.0
    %63 = vadd.xlane.f32.xlu0 %v62
    %v64 = vpop.xlane.xlu0 %63
    %v65 = vsel %vm22, %v52, 0.0
    %66 = vadd.xlane.f32.xlu0 %v65
    %v67 = vpop.xlane.xlu0 %66
    %v68 = vlog2.pop %v55
    %v69 = vmul.f32 %v68, 0.6931472
    %v70 = vlog2.pop %v58
    %v71 = vmul.f32 %v70, 0.6931472
    %v72 = vlog2.pop %v61
    %v73 = vmul.f32 %v72, 0.6931472
    %v74 = vlog2.pop %v64
    %v75 = vmul.f32 %v74, 0.6931472
    %v76 = vlog2.pop %v67
    %v77 = vmul.f32 %v76, 0.6931472
    %v78 = vadd.f32 %v25, %v69
    %v79 = vadd.f32 %v28, %v71
    %v80 = vadd.f32 %v31, %v73
    %v81 = vadd.f32 %v34, %v75
    %v82 = vadd.f32 %v37, %v77
    %v83 = vlaneseq
    %v84 = vand.u32 %v83, 127
    %85 = vset.pattern.permute.xlu0 0
    %86 = vperm.xlu0 %85, %v17
    %v87 = vpop.permute.xlu0 %86
    %88 = vset.pattern.permute.xlu0 0
    %89 = vperm.xlu0 %88, %v18
    %v90 = vpop.permute.xlu0 %89
    %91 = vset.pattern.permute.xlu0 0
    %92 = vperm.xlu0 %91, %v19
    %v93 = vpop.permute.xlu0 %92
    %94 = vset.pattern.permute.xlu0 0
    %95 = vperm.xlu0 %94, %v20
    %v96 = vpop.permute.xlu0 %95
    %97 = vset.pattern.permute.xlu0 0
    %98 = vperm.xlu0 %97, %v21
    %v99 = vpop.permute.xlu0 %98
    %vm100 = vcmp.eq.s32.totalorder %v84, %v87
    %vm101 = vcmp.eq.s32.totalorder %v84, %v90
    %vm102 = vcmp.eq.s32.totalorder %v84, %v93
    %vm103 = vcmp.eq.s32.totalorder %v84, %v96
    %vm104 = vcmp.eq.s32.totalorder %v84, %v99
    %v105 = vsel %vm100, %v12, 0.0
    %v106 = vsel %vm101, %v13, 0.0
    %v107 = vsel %vm102, %v14, 0.0
    %v108 = vsel %vm103, %v15, 0.0
    %v109 = vsel %vm104, %v16, 0.0
    %v110 = vsel %vm22, %v105, 0.0
    %111 = vadd.xlane.f32.xlu0 %v110
    %v112 = vpop.xlane.xlu0 %111
    %v113 = vsel %vm22, %v106, 0.0
    %114 = vadd.xlane.f32.xlu0 %v113
    %v115 = vpop.xlane.xlu0 %114
    %v116 = vsel %vm22, %v107, 0.0
    %117 = vadd.xlane.f32.xlu0 %v116
    %v118 = vpop.xlane.xlu0 %117
    %v119 = vsel %vm22, %v108, 0.0
    %120 = vadd.xlane.f32.xlu0 %v119
    %v121 = vpop.xlane.xlu0 %120
    %v122 = vsel %vm22, %v109, 0.0
    %123 = vadd.xlane.f32.xlu0 %v122
    %v124 = vpop.xlane.xlu0 %123
    %v125 = vsub.f32 %v112, %v78
    %v126 = vsub.f32 %v115, %v79
    %v127 = vsub.f32 %v118, %v80
    %v128 = vsub.f32 %v121, %v81
    %v129 = vsub.f32 %v124, %v82
    %v130 = vmul.f32 %v125, 1.442695
    %v131 = vpow.pop %v130
    %v132 = vmul.f32 %v126, 1.442695
    %v133 = vpow.pop %v132
    %v134 = vmul.f32 %v127, 1.442695
    %v135 = vpow.pop %v134
    %v136 = vmul.f32 %v128, 1.442695
    %v137 = vpow.pop %v136
    %v138 = vmul.f32 %v129, 1.442695
    %v139 = vpow.pop %v138
    %v140 = vadd.f32 %v131, 1e-08
    %v141 = vadd.f32 %v133, 1e-08
    %v142 = vadd.f32 %v135, 1e-08
    %v143 = vadd.f32 %v137, 1e-08
    %v144 = vadd.f32 %v139, 1e-08
    %v145 = vlog2.pop %v140
    %v146 = vmul.f32 %v145, 0.6931472
    %v147 = vlog2.pop %v141
    %v148 = vmul.f32 %v147, 0.6931472
    %v149 = vlog2.pop %v142
    %v150 = vmul.f32 %v149, 0.6931472
    %v151 = vlog2.pop %v143
    %v152 = vmul.f32 %v151, 0.6931472
    %v153 = vlog2.pop %v144
    %v154 = vmul.f32 %v153, 0.6931472
    %v155 = vsub.f32 0.0, %v146
    %v156 = vsub.f32 0.0, %v148
    %v157 = vsub.f32 0.0, %v150
    %v158 = vsub.f32 0.0, %v152
    %v159 = vsub.f32 0.0, %v154
    %v160 = vsub.f32 1.0, %v131
    %v161 = vsub.f32 1.0, %v133
    %v162 = vsub.f32 1.0, %v135
    %v163 = vsub.f32 1.0, %v137
    %v164 = vsub.f32 1.0, %v139
    %v165 = vmul.f32 %v160, %v160
    %v166 = vmul.f32 %v161, %v161
    %v167 = vmul.f32 %v162, %v162
    %v168 = vmul.f32 %v163, %v163
    %v169 = vmul.f32 %v164, %v164
    %v170 = vmul.f32 %v165, 23.5
    %v171 = vmul.f32 %v166, 23.5
    %v172 = vmul.f32 %v167, 23.5
    %v173 = vmul.f32 %v168, 23.5
    %v174 = vmul.f32 %v169, 23.5
    %v175 = vmul.f32 %v170, %v155
    %v176 = vmul.f32 %v171, %v156
    %v177 = vmul.f32 %v172, %v157
    %v178 = vmul.f32 %v173, %v158
    %v179 = vmul.f32 %v174, %v159
    %vm180 = vcmask 7168
    %v181 = vsel %vm180, %v175, 0.0
    %v182 = vsel %vm180, %v176, 0.0
    %v183 = vadd.f32 %v181, %v182
    %v184 = vsel %vm180, %v177, 0.0
    %v185 = vadd.f32 %v183, %v184
    %v186 = vsel %vm180, %v178, 0.0
    %v187 = vadd.f32 %v185, %v186
    %v188 = vsel %vm180, %v179, 0.0
    %v189 = vadd.f32 %v187, %v188
    %190 = vadd.xlane.f32.xlu0 %v189
    %v191 = vpop.xlane.xlu0 %190
    %v192 = vrot.slane %v191, 4
    %v193 = vadd.f32 %v191, %v192
    %v194 = vrot.slane %v193, 2
    %v195 = vadd.f32 %v193, %v194
    %v196 = vrot.slane %v195, 1
    %v197 = vadd.f32 %v195, %v196
    %s198 = vtos %v197
    %v199 = vstv %s198
    %200 = vst [vmem:[#allocation2] sm:$0xff] %v199
    // Predicated region
    $region10: #{tpu_custom_call.1} parent=1 // pred_check
      _
    $region11: #{tpu_custom_call.1} parent=1 // pred_check_branch
      %202 = sbr.rel (0) target = $region13
    $region12: #{tpu_custom_call.1} parent=1 // pred_region
      %s204 = ssub.s32 128, 128
      %205 = vsyncadd [#allocation3], %s204
      %s207 = sshll.u32 [#allocation2], 4
      %s208 = int_to_ptr.vmem [resolvable:$true] %s207
      %210 = dma.vmem_to_hbm [thread:$0]  %s208, 128, %s2, [#allocation3]
    $region13: #{tpu_custom_call.1} parent=1 // pred_fallthru
      _
    // Predicated region
    $region14: #{tpu_custom_call.1} parent=1 // pred_check
      _
    $region15: #{tpu_custom_call.1} parent=1 // pred_check_branch
      %212 = sbr.rel (0) target = $region17
    $region16: #{tpu_custom_call.1} parent=1 // pred_region
      %213 = dma.done [#allocation3], 128
    $region17: #{tpu_custom_call.1} parent=1 // pred_fallthru
      _
    %214 = vsyncpa [#allocation3], 1

</llo_original>
